<compile_context>
chip_gen: v7x
topology: tpu7x:2x2x1
jax: 0.10.0
libtpu: 0.0.40
codegen_flags: <defaults>
</compile_context>

<pallas_src>
import functools

import jax
import jax.numpy as jnp
from jax import lax
from jax.experimental import pallas as pl
from jax.experimental.pallas import tpu as pltpu

EPS = 1e-6
LANE = 128                       # lane-dense last dim (multiple of 128)
DEFAULT_MAX_TILE_ROWS = 2048     # 2048 x 128 f32 = 1 MiB per plane per block
# Below this many elements the fixed pallas_call + glue overhead dominates;
# let XLA fuse the whole (tiny) expression instead.
_PALLAS_MIN_ELEMENTS = 64 * 1024


def _round_up(x, m):
    return -(-x // m) * m


def _wq_lq(dist, air, k_s, inv_k_a):
    """Elementwise part of the module (shared by both kernels)."""
    E_S = k_s * dist + EPS
    lam = (air + EPS) * inv_k_a              # divide hoisted to a multiply
    rho = jnp.minimum(lam * E_S, 0.99)       # torch.clamp(..., max=0.99)
    W_q = rho / (1.0 - rho + EPS) * E_S * 0.5
    L_q = lam * W_q
    return W_q, L_q


@functools.partial(jax.jit, static_argnums=(3, 4), static_argnames=("max_tile_rows",))
def _pallas_forward(x, k_s, k_a, idx_distance, idx_airtime, *,
                    max_tile_rows=DEFAULT_MAX_TILE_ROWS):
    """x: (B, T, F). Returns (Wn, Ln), each (B, T, 1) float32."""
    B, T, _ = x.shape
    n = B * T

    k_s = jnp.asarray(k_s, jnp.float32)
    inv_k_a = 1.0 / jnp.asarray(k_a, jnp.float32)

    # Static feature extraction + lane-dense packing (slice/reshape/pad fuse
    # into one producer fusion per plane under jit).
    dist = x[:, :, idx_distance].astype(jnp.float32).reshape(-1)
    air = x[:, :, idx_airtime].astype(jnp.float32).reshape(-1)

    rows = -(-n // LANE)
    rows_padded = _round_up(rows, 8)              # minimal (sublane) padding
    pad = rows_padded * LANE - n
    tile_rows = min(_round_up(max_tile_rows, 8), rows_padded)
    n_tiles = pl.cdiv(rows_padded, tile_rows)     # last tile may be partial

    dist = jnp.pad(dist, (0, pad)).reshape(rows_padded, LANE)
    air = jnp.pad(air, (0, pad)).reshape(rows_padded, LANE)

    # ---------------------------------------------------------------- pass 0
    # Per-tile min/max of W_q and L_q; the padded tail / OOB rows are masked
    # out so the pad value is irrelevant.
    def reduce_kernel(params_ref, dist_ref, air_ref,
                      wmin_ref, wmax_ref, lmin_ref, lmax_ref):
        W_q, L_q = _wq_lq(dist_ref[...], air_ref[...],
                          params_ref[0], params_ref[1])

        row0 = pl.program_id(0) * tile_rows
        row_id = lax.broadcasted_iota(jnp.int32, W_q.shape, 0) + row0
        lane_id = lax.broadcasted_iota(jnp.int32, W_q.shape, 1)
        valid = row_id * LANE + lane_id < n

        def tile_stat(v, fill, red):
            v = jnp.where(valid, v, fill)
            v = red(v, axis=-1, keepdims=True)        # lane reduce first
            return red(v, axis=0, keepdims=True)      # then sublane reduce

        wmin_ref[...] = jnp.broadcast_to(tile_stat(W_q, jnp.inf, jnp.min), wmin_ref.shape)
        wmax_ref[...] = jnp.broadcast_to(tile_stat(W_q, -jnp.inf, jnp.max), wmax_ref.shape)
        lmin_ref[...] = jnp.broadcast_to(tile_stat(L_q, jnp.inf, jnp.min), lmin_ref.shape)
        lmax_ref[...] = jnp.broadcast_to(tile_stat(L_q, -jnp.inf, jnp.max), lmax_ref.shape)

    feat_spec = pl.BlockSpec((tile_rows, LANE), lambda i: (i, 0))
    stat_spec = pl.BlockSpec((8, LANE), lambda i: (i, 0))    # aligned (8,128) block
    stat_shape = jax.ShapeDtypeStruct((n_tiles * 8, LANE), jnp.float32)

    params_r = jnp.stack([k_s, inv_k_a])                      # (2,) -> SMEM
    wmin_t, wmax_t, lmin_t, lmax_t = pl.pallas_call(
        reduce_kernel,
        grid_spec=pltpu.PrefetchScalarGridSpec(
            num_scalar_prefetch=0,
            grid=(n_tiles,),
            in_specs=[pl.BlockSpec(memory_space=pltpu.SMEM), feat_spec, feat_spec],
            out_specs=(stat_spec, stat_spec, stat_spec, stat_spec),
        ),
        out_shape=(stat_shape,) * 4,
        compiler_params=pltpu.CompilerParams(
            dimension_semantics=("parallel",),
            vmem_limit_bytes=32 * 1024 * 1024,
        ),
    )(params_r, dist, air)

    # Tiny XLA combine of the per-tile stats (exact: min/max are order-free).
    w_min = jnp.min(wmin_t)
    w_max = jnp.max(wmax_t)
    l_min = jnp.min(lmin_t)
    l_max = jnp.max(lmax_t)
    inv_w = 1.0 / (w_max - w_min + EPS)
    inv_l = 1.0 / (l_max - l_min + EPS)

    # ---------------------------------------------------------------- pass 1
    # Recompute the cheap elementwise part and write normalized outputs
    # (cheaper than materializing W_q/L_q to HBM between the passes).
    def normalize_kernel(params_ref, dist_ref, air_ref, wn_ref, ln_ref):
        W_q, L_q = _wq_lq(dist_ref[...], air_ref[...],
                          params_ref[0], params_ref[1])
        wn_ref[...] = ((W_q - params_ref[2]) * params_ref[3]).astype(wn_ref.dtype)
        ln_ref[...] = ((L_q - params_ref[4]) * params_ref[5]).astype(ln_ref.dtype)

    params_n = jnp.stack([k_s, inv_k_a, w_min, inv_w, l_min, inv_l])   # (6,) -> SMEM
    out_shape = jax.ShapeDtypeStruct((rows_padded, LANE), jnp.float32)
    wn, ln = pl.pallas_call(
        normalize_kernel,
        grid_spec=pltpu.PrefetchScalarGridSpec(
            num_scalar_prefetch=0,
            grid=(n_tiles,),
            in_specs=[pl.BlockSpec(memory_space=pltpu.SMEM), feat_spec, feat_spec],
            out_specs=(feat_spec, feat_spec),
        ),
        out_shape=(out_shape, out_shape),
        compiler_params=pltpu.CompilerParams(
            dimension_semantics=("parallel",),
            vmem_limit_bytes=32 * 1024 * 1024,
        ),
    )(params_n, dist, air)

    wn = wn.reshape(-1)[:n].reshape(B, T, 1)
    ln = ln.reshape(-1)[:n].reshape(B, T, 1)
    return wn, ln


def _reference(x, k_s, k_a, idx_distance, idx_airtime):
    """Pure-JAX reference of the torch forward (also the tiny-input path)."""
    dist = x[:, :, idx_distance].astype(jnp.float32)
    air = x[:, :, idx_airtime].astype(jnp.float32)
    E_S = k_s * dist + EPS
    lam = (air + EPS) / k_a
    rho = jnp.minimum(lam * E_S, 0.99)
    W_q = rho / (1.0 - rho + EPS) * E_S * 0.5
    Wn = (W_q - W_q.min()) / (W_q.max() - W_q.min() + EPS)
    L_q = lam * W_q
    Ln = (L_q - L_q.min()) / (L_q.max() - L_q.min() + EPS)
    return Wn[..., None], Ln[..., None]


def residual_delay_layer(x, k_s, k_a, idx_distance, idx_airtime, *,
                         force_pallas=False,
                         max_tile_rows=DEFAULT_MAX_TILE_ROWS):
    """Dispatch: tiny inputs go through the fused XLA path, large through Pallas."""
    B, T, _ = x.shape
    if force_pallas or B * T >= _PALLAS_MIN_ELEMENTS:
        return _pallas_forward(x, k_s, k_a, idx_distance, idx_airtime,
                               max_tile_rows=max_tile_rows)
    return _reference(x, k_s, k_a, idx_distance, idx_airtime)


if __name__ == "__main__":
    key = jax.random.PRNGKey(0)
    idx_distance, idx_airtime = 2, 4
    k_s = jnp.float32(1.0)   # parameters as initialized in the module
    k_a = jnp.float32(1.0)

    # Small demo shape in the module's (batch, seq, feature) convention.
    B, T, F = 2, 8, 6
    x = jax.random.uniform(key, (B, T, F), dtype=jnp.float32,
                           minval=0.1, maxval=2.0)

    wn, ln = residual_delay_layer(x, k_s, k_a, idx_distance, idx_airtime,
                                  force_pallas=True)
    jax.block_until_ready((wn, ln))

    wn_ref, ln_ref = _reference(x, k_s, k_a, idx_distance, idx_airtime)
    assert wn.shape == (B, T, 1) and ln.shape == (B, T, 1)
    assert jnp.allclose(wn, wn_ref, atol=1e-5, rtol=1e-5)
    assert jnp.allclose(ln, ln_ref, atol=1e-5, rtol=1e-5)

    # Multi-tile check: small tile size forces several row tiles including a
    # PARTIAL final tile (uneven grid) plus a zero-padded tail, exercising the
    # in-kernel validity mask and the split reduce -> combine -> normalize path.
    key2 = jax.random.fold_in(key, 1)
    B2, T2 = 4, 5000
    x2 = jax.random.uniform(key2, (B2, T2, F), dtype=jnp.float32,
                            minval=0.1, maxval=3.0)
    wn2, ln2 = residual_delay_layer(x2, k_s, k_a, idx_distance, idx_airtime,
                                    force_pallas=True, max_tile_rows=64)
    jax.block_until_ready((wn2, ln2))
    wn2_ref, ln2_ref = _reference(x2, k_s, k_a, idx_distance, idx_airtime)
    assert jnp.allclose(wn2, wn2_ref, atol=1e-5, rtol=1e-5)
    assert jnp.allclose(ln2, ln2_ref, atol=1e-5, rtol=1e-5)

    # Exact-fit check: n is a multiple of 8*128 so pad == 0 (no output slice
    # copy) and the grid divides evenly.
    key3 = jax.random.fold_in(key, 2)
    B3, T3 = 8, 2048
    x3 = jax.random.uniform(key3, (B3, T3, F), dtype=jnp.float32,
                            minval=0.1, maxval=2.5)
    wn3, ln3 = residual_delay_layer(x3, k_s, k_a, idx_distance, idx_airtime,
                                    force_pallas=True, max_tile_rows=32)
    jax.block_until_ready((wn3, ln3))
    wn3_ref, ln3_ref = _reference(x3, k_s, k_a, idx_distance, idx_airtime)
    assert jnp.allclose(wn3, wn3_ref, atol=1e-5, rtol=1e-5)
    assert jnp.allclose(ln3, ln3_ref, atol=1e-5, rtol=1e-5)

    print("KERNEL_OK")
</pallas_src>

<mosaic_0001>
module attributes {stable_mosaic.version = 11 : i64} {
  func.func @reduce_kernel(%arg0: i32, %arg1: memref<2xf32, #tpu.memory_space<smem>>, %arg2: memref<8x128xf32, #tpu.memory_space<vmem>>, %arg3: memref<8x128xf32, #tpu.memory_space<vmem>>, %arg4: memref<8x128xf32, #tpu.memory_space<vmem>>, %arg5: memref<8x128xf32, #tpu.memory_space<vmem>>, %arg6: memref<8x128xf32, #tpu.memory_space<vmem>>, %arg7: memref<8x128xf32, #tpu.memory_space<vmem>>) attributes {dimension_semantics = [#tpu.dimension_semantics<parallel>], iteration_bounds = array<i64: 1>, scalar_prefetch = 0 : i64, scratch_operands = 0 : i64, tpu.core_type = #tpu.core_type<tc>, window_params = [{transform_indices = @transform_0, window_bounds = array<i64: 2>}, {transform_indices = @transform_1, window_bounds = array<i64: 8, 128>}, {transform_indices = @transform_2, window_bounds = array<i64: 8, 128>}, {transform_indices = @transform_3, window_bounds = array<i64: 8, 128>}, {transform_indices = @transform_4, window_bounds = array<i64: 8, 128>}, {transform_indices = @transform_5, window_bounds = array<i64: 8, 128>}, {transform_indices = @transform_6, window_bounds = array<i64: 8, 128>}]} {
    %c0 = arith.constant 0 : index
    %c0_0 = arith.constant 0 : index
    %0 = vector.load %arg2[%c0, %c0_0] : memref<8x128xf32, #tpu.memory_space<vmem>>, vector<8x128xf32>
    %c0_1 = arith.constant 0 : index
    %c0_2 = arith.constant 0 : index
    %1 = vector.load %arg3[%c0_1, %c0_2] : memref<8x128xf32, #tpu.memory_space<vmem>>, vector<8x128xf32>
    %c0_3 = arith.constant 0 : index
    %2 = memref.load %arg1[%c0_3] : memref<2xf32, #tpu.memory_space<smem>>
    %c1 = arith.constant 1 : index
    %3 = memref.load %arg1[%c1] : memref<2xf32, #tpu.memory_space<smem>>
    %4 = vector.broadcast %2 : f32 to vector<8x128xf32>
    %5 = arith.mulf %4, %0 : vector<8x128xf32>
    %cst = arith.constant 9.99999997E-7 : f32
    %6 = vector.broadcast %cst : f32 to vector<8x128xf32>
    %7 = arith.addf %5, %6 : vector<8x128xf32>
    %cst_4 = arith.constant 9.99999997E-7 : f32
    %8 = vector.broadcast %cst_4 : f32 to vector<8x128xf32>
    %9 = arith.addf %1, %8 : vector<8x128xf32>
    %10 = vector.broadcast %3 : f32 to vector<8x128xf32>
    %11 = arith.mulf %9, %10 : vector<8x128xf32>
    %12 = arith.mulf %11, %7 : vector<8x128xf32>
    %cst_5 = arith.constant 9.900000e-01 : f32
    %13 = vector.broadcast %cst_5 : f32 to vector<8x128xf32>
    %14 = arith.minimumf %12, %13 : vector<8x128xf32>
    %cst_6 = arith.constant 1.000000e+00 : f32
    %15 = vector.broadcast %cst_6 : f32 to vector<8x128xf32>
    %16 = arith.subf %15, %14 : vector<8x128xf32>
    %cst_7 = arith.constant 9.99999997E-7 : f32
    %17 = vector.broadcast %cst_7 : f32 to vector<8x128xf32>
    %18 = arith.addf %16, %17 : vector<8x128xf32>
    %19 = arith.divf %14, %18 : vector<8x128xf32>
    %20 = arith.mulf %19, %7 : vector<8x128xf32>
    %cst_8 = arith.constant 5.000000e-01 : f32
    %21 = vector.broadcast %cst_8 : f32 to vector<8x128xf32>
    %22 = arith.mulf %20, %21 : vector<8x128xf32>
    %23 = arith.mulf %11, %22 : vector<8x128xf32>
    %c8_i32 = arith.constant 8 : i32
    %24 = arith.muli %arg0, %c8_i32 : i32
    %25 = tpu.iota {dimensions = array<i32: 0>} : vector<8x128xi32>
    %26 = vector.broadcast %24 : i32 to vector<8x128xi32>
    %27 = arith.addi %25, %26 : vector<8x128xi32>
    %28 = tpu.iota {dimensions = array<i32: 1>} : vector<8x128xi32>
    %c128_i32 = arith.constant 128 : i32
    %29 = vector.broadcast %c128_i32 : i32 to vector<8x128xi32>
    %30 = arith.muli %27, %29 : vector<8x128xi32>
    %31 = arith.addi %30, %28 : vector<8x128xi32>
    %c16_i32 = arith.constant 16 : i32
    %32 = vector.broadcast %c16_i32 : i32 to vector<8x128xi32>
    %33 = arith.cmpi slt, %31, %32 : vector<8x128xi32>
    %cst_9 = arith.constant 0x7F800000 : f32
    %34 = vector.broadcast %cst_9 : f32 to vector<8x128xf32>
    %35 = arith.select %33, %22, %34 : vector<8x128xi1>, vector<8x128xf32>
    %cst_10 = arith.constant dense<0x7F800000> : vector<8xf32>
    %36 = vector.multi_reduction <minimumf>, %35, %cst_10 [1] : vector<8x128xf32> to vector<8xf32>
    %37 = vector.shape_cast %36 : vector<8xf32> to vector<8x1xf32>
    %cst_11 = arith.constant dense<0x7F800000> : vector<1xf32>
    %38 = vector.multi_reduction <minimumf>, %37, %cst_11 [0] : vector<8x1xf32> to vector<1xf32>
    %39 = vector.shape_cast %38 : vector<1xf32> to vector<1x1xf32>
    %40 = vector.shape_cast %39 : vector<1x1xf32> to vector<1x1xf32>
    %41 = vector.broadcast %40 : vector<1x1xf32> to vector<8x128xf32>
    %c0_12 = arith.constant 0 : index
    %c0_13 = arith.constant 0 : index
    %42 = vector.load %arg4[%c0_12, %c0_13] : memref<8x128xf32, #tpu.memory_space<vmem>>, vector<8x128xf32>
    tpu.vector_store %arg4[%c0_12, %c0_13], %41 {strides = array<i32>} : memref<8x128xf32, #tpu.memory_space<vmem>>, vector<8x128xf32>,
    %cst_14 = arith.constant 0xFF800000 : f32
    %43 = vector.broadcast %cst_14 : f32 to vector<8x128xf32>
    %44 = arith.select %33, %22, %43 : vector<8x128xi1>, vector<8x128xf32>
    %cst_15 = arith.constant dense<0xFF800000> : vector<8xf32>
    %45 = vector.multi_reduction <maximumf>, %44, %cst_15 [1] : vector<8x128xf32> to vector<8xf32>
    %46 = vector.shape_cast %45 : vector<8xf32> to vector<8x1xf32>
    %cst_16 = arith.constant dense<0xFF800000> : vector<1xf32>
    %47 = vector.multi_reduction <maximumf>, %46, %cst_16 [0] : vector<8x1xf32> to vector<1xf32>
    %48 = vector.shape_cast %47 : vector<1xf32> to vector<1x1xf32>
    %49 = vector.shape_cast %48 : vector<1x1xf32> to vector<1x1xf32>
    %50 = vector.broadcast %49 : vector<1x1xf32> to vector<8x128xf32>
    %c0_17 = arith.constant 0 : index
    %c0_18 = arith.constant 0 : index
    %51 = vector.load %arg5[%c0_17, %c0_18] : memref<8x128xf32, #tpu.memory_space<vmem>>, vector<8x128xf32>
    tpu.vector_store %arg5[%c0_17, %c0_18], %50 {strides = array<i32>} : memref<8x128xf32, #tpu.memory_space<vmem>>, vector<8x128xf32>,
    %cst_19 = arith.constant 0x7F800000 : f32
    %52 = vector.broadcast %cst_19 : f32 to vector<8x128xf32>
    %53 = arith.select %33, %23, %52 : vector<8x128xi1>, vector<8x128xf32>
    %cst_20 = arith.constant dense<0x7F800000> : vector<8xf32>
    %54 = vector.multi_reduction <minimumf>, %53, %cst_20 [1] : vector<8x128xf32> to vector<8xf32>
    %55 = vector.shape_cast %54 : vector<8xf32> to vector<8x1xf32>
    %cst_21 = arith.constant dense<0x7F800000> : vector<1xf32>
    %56 = vector.multi_reduction <minimumf>, %55, %cst_21 [0] : vector<8x1xf32> to vector<1xf32>
    %57 = vector.shape_cast %56 : vector<1xf32> to vector<1x1xf32>
    %58 = vector.shape_cast %57 : vector<1x1xf32> to vector<1x1xf32>
    %59 = vector.broadcast %58 : vector<1x1xf32> to vector<8x128xf32>
    %c0_22 = arith.constant 0 : index
    %c0_23 = arith.constant 0 : index
    %60 = vector.load %arg6[%c0_22, %c0_23] : memref<8x128xf32, #tpu.memory_space<vmem>>, vector<8x128xf32>
    tpu.vector_store %arg6[%c0_22, %c0_23], %59 {strides = array<i32>} : memref<8x128xf32, #tpu.memory_space<vmem>>, vector<8x128xf32>,
    %cst_24 = arith.constant 0xFF800000 : f32
    %61 = vector.broadcast %cst_24 : f32 to vector<8x128xf32>
    %62 = arith.select %33, %23, %61 : vector<8x128xi1>, vector<8x128xf32>
    %cst_25 = arith.constant dense<0xFF800000> : vector<8xf32>
    %63 = vector.multi_reduction <maximumf>, %62, %cst_25 [1] : vector<8x128xf32> to vector<8xf32>
    %64 = vector.shape_cast %63 : vector<8xf32> to vector<8x1xf32>
    %cst_26 = arith.constant dense<0xFF800000> : vector<1xf32>
    %65 = vector.multi_reduction <maximumf>, %64, %cst_26 [0] : vector<8x1xf32> to vector<1xf32>
    %66 = vector.shape_cast %65 : vector<1xf32> to vector<1x1xf32>
    %67 = vector.shape_cast %66 : vector<1x1xf32> to vector<1x1xf32>
    %68 = vector.broadcast %67 : vector<1x1xf32> to vector<8x128xf32>
    %c0_27 = arith.constant 0 : index
    %c0_28 = arith.constant 0 : index
    %69 = vector.load %arg7[%c0_27, %c0_28] : memref<8x128xf32, #tpu.memory_space<vmem>>, vector<8x128xf32>
    tpu.vector_store %arg7[%c0_27, %c0_28], %68 {strides = array<i32>} : memref<8x128xf32, #tpu.memory_space<vmem>>, vector<8x128xf32>,
    return
  }
  func.func @transform_0(%arg0: i32) -> i32 {
    %c0_i32 = arith.constant 0 : i32
    %c0_i32_0 = arith.constant 0 : i32
    return %c0_i32 : i32
  }
  func.func @transform_1(%arg0: i32) -> (i32, i32) {
    %c0_i32 = arith.constant 0 : i32
    %c0_i32_0 = arith.constant 0 : i32
    return %arg0, %c0_i32 : i32, i32
  }
  func.func @transform_2(%arg0: i32) -> (i32, i32) {
    %c0_i32 = arith.constant 0 : i32
    %c0_i32_0 = arith.constant 0 : i32
    return %arg0, %c0_i32 : i32, i32
  }
  func.func @transform_3(%arg0: i32) -> (i32, i32) {
    %c0_i32 = arith.constant 0 : i32
    %c0_i32_0 = arith.constant 0 : i32
    return %arg0, %c0_i32 : i32, i32
  }
  func.func @transform_4(%arg0: i32) -> (i32, i32) {
    %c0_i32 = arith.constant 0 : i32
    %c0_i32_0 = arith.constant 0 : i32
    return %arg0, %c0_i32 : i32, i32
  }
  func.func @transform_5(%arg0: i32) -> (i32, i32) {
    %c0_i32 = arith.constant 0 : i32
    %c0_i32_0 = arith.constant 0 : i32
    return %arg0, %c0_i32 : i32, i32
  }
  func.func @transform_6(%arg0: i32) -> (i32, i32) {
    %c0_i32 = arith.constant 0 : i32
    %c0_i32_0 = arith.constant 0 : i32
    return %arg0, %c0_i32 : i32, i32
  }
}

module attributes {stable_mosaic.version = 11 : i64} {
  func.func @normalize_kernel(%arg0: i32, %arg1: memref<6xf32, #tpu.memory_space<smem>>, %arg2: memref<8x128xf32, #tpu.memory_space<vmem>>, %arg3: memref<8x128xf32, #tpu.memory_space<vmem>>, %arg4: memref<8x128xf32, #tpu.memory_space<vmem>>, %arg5: memref<8x128xf32, #tpu.memory_space<vmem>>) attributes {dimension_semantics = [#tpu.dimension_semantics<parallel>], iteration_bounds = array<i64: 1>, scalar_prefetch = 0 : i64, scratch_operands = 0 : i64, tpu.core_type = #tpu.core_type<tc>, window_params = [{transform_indices = @transform_0, window_bounds = array<i64: 6>}, {transform_indices = @transform_1, window_bounds = array<i64: 8, 128>}, {transform_indices = @transform_2, window_bounds = array<i64: 8, 128>}, {transform_indices = @transform_3, window_bounds = array<i64: 8, 128>}, {transform_indices = @transform_4, window_bounds = array<i64: 8, 128>}]} {
    %c0 = arith.constant 0 : index
    %c0_0 = arith.constant 0 : index
    %0 = vector.load %arg2[%c0, %c0_0] : memref<8x128xf32, #tpu.memory_space<vmem>>, vector<8x128xf32>
    %c0_1 = arith.constant 0 : index
    %c0_2 = arith.constant 0 : index
    %1 = vector.load %arg3[%c0_1, %c0_2] : memref<8x128xf32, #tpu.memory_space<vmem>>, vector<8x128xf32>
    %c0_3 = arith.constant 0 : index
    %2 = memref.load %arg1[%c0_3] : memref<6xf32, #tpu.memory_space<smem>>
    %c1 = arith.constant 1 : index
    %3 = memref.load %arg1[%c1] : memref<6xf32, #tpu.memory_space<smem>>
    %4 = vector.broadcast %2 : f32 to vector<8x128xf32>
    %5 = arith.mulf %4, %0 : vector<8x128xf32>
    %cst = arith.constant 9.99999997E-7 : f32
    %6 = vector.broadcast %cst : f32 to vector<8x128xf32>
    %7 = arith.addf %5, %6 : vector<8x128xf32>
    %cst_4 = arith.constant 9.99999997E-7 : f32
    %8 = vector.broadcast %cst_4 : f32 to vector<8x128xf32>
    %9 = arith.addf %1, %8 : vector<8x128xf32>
    %10 = vector.broadcast %3 : f32 to vector<8x128xf32>
    %11 = arith.mulf %9, %10 : vector<8x128xf32>
    %12 = arith.mulf %11, %7 : vector<8x128xf32>
    %cst_5 = arith.constant 9.900000e-01 : f32
    %13 = vector.broadcast %cst_5 : f32 to vector<8x128xf32>
    %14 = arith.minimumf %12, %13 : vector<8x128xf32>
    %cst_6 = arith.constant 1.000000e+00 : f32
    %15 = vector.broadcast %cst_6 : f32 to vector<8x128xf32>
    %16 = arith.subf %15, %14 : vector<8x128xf32>
    %cst_7 = arith.constant 9.99999997E-7 : f32
    %17 = vector.broadcast %cst_7 : f32 to vector<8x128xf32>
    %18 = arith.addf %16, %17 : vector<8x128xf32>
    %19 = arith.divf %14, %18 : vector<8x128xf32>
    %20 = arith.mulf %19, %7 : vector<8x128xf32>
    %cst_8 = arith.constant 5.000000e-01 : f32
    %21 = vector.broadcast %cst_8 : f32 to vector<8x128xf32>
    %22 = arith.mulf %20, %21 : vector<8x128xf32>
    %23 = arith.mulf %11, %22 : vector<8x128xf32>
    %c2 = arith.constant 2 : index
    %24 = memref.load %arg1[%c2] : memref<6xf32, #tpu.memory_space<smem>>
    %25 = vector.broadcast %24 : f32 to vector<8x128xf32>
    %26 = arith.subf %22, %25 : vector<8x128xf32>
    %c3 = arith.constant 3 : index
    %27 = memref.load %arg1[%c3] : memref<6xf32, #tpu.memory_space<smem>>
    %28 = vector.broadcast %27 : f32 to vector<8x128xf32>
    %29 = arith.mulf %26, %28 : vector<8x128xf32>
    %c0_9 = arith.constant 0 : index
    %c0_10 = arith.constant 0 : index
    %30 = vector.load %arg4[%c0_9, %c0_10] : memref<8x128xf32, #tpu.memory_space<vmem>>, vector<8x128xf32>
    tpu.vector_store %arg4[%c0_9, %c0_10], %29 {strides = array<i32>} : memref<8x128xf32, #tpu.memory_space<vmem>>, vector<8x128xf32>,
    %c4 = arith.constant 4 : index
    %31 = memref.load %arg1[%c4] : memref<6xf32, #tpu.memory_space<smem>>
    %32 = vector.broadcast %31 : f32 to vector<8x128xf32>
    %33 = arith.subf %23, %32 : vector<8x128xf32>
    %c5 = arith.constant 5 : index
    %34 = memref.load %arg1[%c5] : memref<6xf32, #tpu.memory_space<smem>>
    %35 = vector.broadcast %34 : f32 to vector<8x128xf32>
    %36 = arith.mulf %33, %35 : vector<8x128xf32>
    %c0_11 = arith.constant 0 : index
    %c0_12 = arith.constant 0 : index
    %37 = vector.load %arg5[%c0_11, %c0_12] : memref<8x128xf32, #tpu.memory_space<vmem>>, vector<8x128xf32>
    tpu.vector_store %arg5[%c0_11, %c0_12], %36 {strides = array<i32>} : memref<8x128xf32, #tpu.memory_space<vmem>>, vector<8x128xf32>,
    return
  }
  func.func @transform_0(%arg0: i32) -> i32 {
    %c0_i32 = arith.constant 0 : i32
    %c0_i32_0 = arith.constant 0 : i32
    return %c0_i32 : i32
  }
  func.func @transform_1(%arg0: i32) -> (i32, i32) {
    %c0_i32 = arith.constant 0 : i32
    %c0_i32_0 = arith.constant 0 : i32
    return %arg0, %c0_i32 : i32, i32
  }
  func.func @transform_2(%arg0: i32) -> (i32, i32) {
    %c0_i32 = arith.constant 0 : i32
    %c0_i32_0 = arith.constant 0 : i32
    return %arg0, %c0_i32 : i32, i32
  }
  func.func @transform_3(%arg0: i32) -> (i32, i32) {
    %c0_i32 = arith.constant 0 : i32
    %c0_i32_0 = arith.constant 0 : i32
    return %arg0, %c0_i32 : i32, i32
  }
  func.func @transform_4(%arg0: i32) -> (i32, i32) {
    %c0_i32 = arith.constant 0 : i32
    %c0_i32_0 = arith.constant 0 : i32
    return %arg0, %c0_i32 : i32, i32
  }
}

</mosaic_0001>

<llo_original>
// kernel: squeeze.3
$region0: #{squeeze.3}
  %s0 = inlined_call_operand.vmem [shape: f32[2,8,1], index: 0, kind: input, shape index: {}]
  %s1 = inlined_call_operand.vmem [shape: f32[16], index: 1, kind: output, shape index: {}]
  $region1: #{squeeze.3} parent=0
    #allocation0 [shape = 'u8[4096]{0}', space=vmem, size = 0x1000, scoped, tag = 'scoped mem for output reshape']
    #allocation1 [shape = 'u8[4096]{0}', space=vmem, size = 0x1000, scoped, tag = 'scoped mem for input reshape']
    %s3 = sshllo.u32 0, 2
    %v4 = vld [vmem:[%s0] sm:%s3]
    %5 = vst [vmem:[#allocation1] sm:%s3] %v4
    %v6 = vld [vmem:[#allocation1] sm:$0x1]
    %vm7 = vcmask 64512
    %8 = vst.msk [vmem:[#allocation0] sm:$0x1] %vm7, %v6
    %s9 = scalar_lea.vmem [#allocation1], 1
    %v10 = vld [vmem:[%s9] sm:$0x1]
    %11 = vrot.lane.b32.xlu0 %v10, 8
    %v12 = vpop.permute.xlu0 %11
    %vm13 = vcmask 130112
    %14 = vst.msk [vmem:[#allocation0] sm:$0x1] %vm13, %v12
    %s16 = sshllo.u32 0, 1
    %v18 = vld [vmem:[#allocation0] sm:%s16]
    %s19 = sshllo.u32 0, 1
    %20 = vst [vmem:[%s1] sm:%s19] %v18

// kernel: _pallas_forward.3
$region0: #{_pallas_forward.3}
  #allocation0 [shape = 'u32[]', space=smem, size = 0x4, offset = 0x4, fixed_abs, tag = 'smem constant byte address 0x4 - core index']
  #allocation1 [shape = 'u32[144,128]{1,0:T(1,128)}', space=vmem, size = 0x12000, scoped, tag = 'internal scratch']
  %s0 = inlined_call_operand.vmem [shape: f32[6], index: 0, kind: input, shape index: {}]
  %s1 = inlined_call_operand.vmem [shape: f32[8,128], index: 1, kind: input, shape index: {}]
  %s2 = inlined_call_operand.vmem [shape: f32[8,128], index: 2, kind: input, shape index: {}]
  %s3 = inlined_call_operand.vmem [shape: f32[8,128], index: 3, kind: output, shape index: {0}]
  %s4 = inlined_call_operand.vmem [shape: f32[8,128], index: 4, kind: output, shape index: {1}]
  %5 = xla_tuple %s3, %s4
  %s6 = sld [smem:[#allocation0]]
  $region34: #{_pallas_forward.3} parent=0
    _
  %s8 = ssub.s32 1, %s6
  %s9 = scalar_select 0, %s8, %s6
  $region1: #{_pallas_forward.3} parent=0
    #allocation2 [shape = 'u8[512]{0}', space=smem, size = 0x200, scoped, tag = 'input window, operand 0, single buffered']
    #allocation3 [shape = 's32[1]{0}', space=sflag, size = 0x4, scoped, tag = 'scoped memory for _pallas_forward.3']
    %10 = vsyncpa [#allocation3], 0
    // Predicated region
    $region2: #{_pallas_forward.3} parent=1 // pred_check
      _
    $region3: #{_pallas_forward.3} parent=1 // pred_check_branch
      %12 = sbr.rel (0) target = $region5
    $region4: #{_pallas_forward.3} parent=1 // pred_region
      %s14 = ssub.s32 16, 16
      %15 = vsyncadd [#allocation3], %s14
      %s17 = sshll.u32 %s0, 4
      %s18 = int_to_ptr.vmem [resolvable:$true] %s17
      %20 = dma.vmem_to_smem %s18, 16, [#allocation2], [#allocation3]
    $region5: #{_pallas_forward.3} parent=1 // pred_fallthru
      _
    // Predicated region
    $region6: #{_pallas_forward.3} parent=1 // pred_check
      _
    $region7: #{_pallas_forward.3} parent=1 // pred_check_branch
      %22 = sbr.rel (0) target = $region9
    $region8: #{_pallas_forward.3} parent=1 // pred_region
      _
    $region9: #{_pallas_forward.3} parent=1 // pred_fallthru
      _
    // Predicated region
    $region10: #{_pallas_forward.3} parent=1 // pred_check
      _
    $region11: #{_pallas_forward.3} parent=1 // pred_check_branch
      %24 = sbr.rel (0) target = $region13
    $region12: #{_pallas_forward.3} parent=1 // pred_region
      _
    $region13: #{_pallas_forward.3} parent=1 // pred_fallthru
      _
    // Predicated region
    $region14: #{_pallas_forward.3} parent=1 // pred_check
      _
    $region15: #{_pallas_forward.3} parent=1 // pred_check_branch
      %26 = sbr.rel (0) target = $region17
    $region16: #{_pallas_forward.3} parent=1 // pred_region
      %27 = dma.done [#allocation3], 16
    $region17: #{_pallas_forward.3} parent=1 // pred_fallthru
      _
    %28 = sfence
    %v29 = vld [vmem:[%s1] sm:$0xff]
    %v30 = vld [vmem:[%s2] sm:$0xff]
    %s31 = sld [smem:[#allocation2]]
    %s32 = sld [smem:[#allocation2 + $0x1]]
    %v33 = vstv %s31
    %v34 = vmul.f32 %v33, %v29
    %v35 = vadd.f32 %v34, 1e-06
    %v36 = vadd.f32 %v30, 1e-06
    %v37 = vstv %s32
    %v38 = vmul.f32 %v36, %v37
    %v39 = vmul.f32 %v38, %v35
    %v40 = vmin.f32 %v39, 0.99
    %v41 = vsub.f32 1.0, %v40
    %v42 = vadd.f32 %v41, 1e-06
    %v43 = vrcp.pop %v42
    %v44 = vmul.f32 %v40, %v43
    %v45 = vmul.f32 %v44, %v35
    %v46 = vmul.f32 %v45, 0.5
    %v47 = vmul.f32 %v38, %v46
    %s48 = sld [smem:[#allocation2 + $0x2]]
    %v49 = vstv %s48
    %v50 = vsub.f32 %v46, %v49
    %s51 = sld [smem:[#allocation2 + $0x3]]
    %v52 = vstv %s51
    %v53 = vmul.f32 %v50, %v52
    %54 = vst [vmem:[%s3] sm:$0xff] %v53
    %s55 = sld [smem:[#allocation2 + $0x4]]
    %v56 = vstv %s55
    %v57 = vsub.f32 %v47, %v56
    %s58 = sld [smem:[#allocation2 + $0x5]]
    %v59 = vstv %s58
    %v60 = vmul.f32 %v57, %v59
    %61 = vst [vmem:[%s4] sm:$0xff] %v60
    // Predicated region
    $region18: #{_pallas_forward.3} parent=1 // pred_check
      _
    $region19: #{_pallas_forward.3} parent=1 // pred_check_branch
      %63 = sbr.rel (0) target = $region21
    $region20: #{_pallas_forward.3} parent=1 // pred_region
      _
    $region21: #{_pallas_forward.3} parent=1 // pred_fallthru
      _
    // Predicated region
    $region22: #{_pallas_forward.3} parent=1 // pred_check
      _
    $region23: #{_pallas_forward.3} parent=1 // pred_check_branch
      %65 = sbr.rel (0) target = $region25
    $region24: #{_pallas_forward.3} parent=1 // pred_region
      _
    $region25: #{_pallas_forward.3} parent=1 // pred_fallthru
      _
    // Predicated region
    $region26: #{_pallas_forward.3} parent=1 // pred_check
      _
    $region27: #{_pallas_forward.3} parent=1 // pred_check_branch
      %67 = sbr.rel (0) target = $region29
    $region28: #{_pallas_forward.3} parent=1 // pred_region
      _
    $region29: #{_pallas_forward.3} parent=1 // pred_fallthru
      _
    // Predicated region
    $region30: #{_pallas_forward.3} parent=1 // pred_check
      _
    $region31: #{_pallas_forward.3} parent=1 // pred_check_branch
      %69 = sbr.rel (0) target = $region33
    $region32: #{_pallas_forward.3} parent=1 // pred_region
      _
    $region33: #{_pallas_forward.3} parent=1 // pred_fallthru
      _
    %70 = vsyncpa [#allocation3], 1

// kernel: _pallas_forward.2
$region0: #{_pallas_forward.2}
  #allocation0 [shape = 'u32[]', space=smem, size = 0x4, offset = 0x4, fixed_abs, tag = 'smem constant byte address 0x4 - core index']
  #allocation1 [shape = 'u32[144,128]{1,0:T(1,128)}', space=vmem, size = 0x12000, scoped, tag = 'internal scratch']
  %s0 = inlined_call_operand.vmem [shape: f32[2], index: 0, kind: input, shape index: {}]
  %s1 = inlined_call_operand.vmem [shape: f32[8,128], index: 1, kind: input, shape index: {}]
  %s2 = inlined_call_operand.vmem [shape: f32[8,128], index: 2, kind: input, shape index: {}]
  %s3 = inlined_call_operand.vmem [shape: f32[8,128], index: 3, kind: output, shape index: {0}]
  %s4 = inlined_call_operand.vmem [shape: f32[8,128], index: 4, kind: output, shape index: {1}]
  %s5 = inlined_call_operand.vmem [shape: f32[8,128], index: 5, kind: output, shape index: {2}]
  %s6 = inlined_call_operand.vmem [shape: f32[8,128], index: 6, kind: output, shape index: {3}]
  %7 = xla_tuple %s3, %s4, %s5, %s6
  %s8 = sld [smem:[#allocation0]]
  $region50: #{_pallas_forward.2} parent=0
    _
  %s10 = ssub.s32 1, %s8
  %s11 = scalar_select 0, %s10, %s8
  $region1: #{_pallas_forward.2} parent=0
    #allocation2 [shape = 'u8[512]{0}', space=smem, size = 0x200, scoped, tag = 'input window, operand 0, single buffered']
    #allocation3 [shape = 's32[1]{0}', space=sflag, size = 0x4, scoped, tag = 'scoped memory for _pallas_forward.2']
    %12 = vsyncpa [#allocation3], 0
    // Predicated region
    $region2: #{_pallas_forward.2} parent=1 // pred_check
      _
    $region3: #{_pallas_forward.2} parent=1 // pred_check_branch
      %14 = sbr.rel (0) target = $region5
    $region4: #{_pallas_forward.2} parent=1 // pred_region
      %s16 = ssub.s32 16, 16
      %17 = vsyncadd [#allocation3], %s16
      %s19 = sshll.u32 %s0, 4
      %s20 = int_to_ptr.vmem [resolvable:$true] %s19
      %22 = dma.vmem_to_smem %s20, 16, [#allocation2], [#allocation3]
    $region5: #{_pallas_forward.2} parent=1 // pred_fallthru
      _
    // Predicated region
    $region6: #{_pallas_forward.2} parent=1 // pred_check
      _
    $region7: #{_pallas_forward.2} parent=1 // pred_check_branch
      %24 = sbr.rel (0) target = $region9
    $region8: #{_pallas_forward.2} parent=1 // pred_region
      _
    $region9: #{_pallas_forward.2} parent=1 // pred_fallthru
      _
    // Predicated region
    $region10: #{_pallas_forward.2} parent=1 // pred_check
      _
    $region11: #{_pallas_forward.2} parent=1 // pred_check_branch
      %26 = sbr.rel (0) target = $region13
    $region12: #{_pallas_forward.2} parent=1 // pred_region
      _
    $region13: #{_pallas_forward.2} parent=1 // pred_fallthru
      _
    // Predicated region
    $region14: #{_pallas_forward.2} parent=1 // pred_check
      _
    $region15: #{_pallas_forward.2} parent=1 // pred_check_branch
      %28 = sbr.rel (0) target = $region17
    $region16: #{_pallas_forward.2} parent=1 // pred_region
      %29 = dma.done [#allocation3], 16
    $region17: #{_pallas_forward.2} parent=1 // pred_fallthru
      _
    %30 = sfence
    %v31 = vld [vmem:[%s1] sm:$0xff]
    %v32 = vld [vmem:[%s2] sm:$0xff]
    %s33 = sld [smem:[#allocation2]]
    %s34 = sld [smem:[#allocation2 + $0x1]]
    %v35 = vstv %s33
    %v36 = vmul.f32 %v35, %v31
    %v37 = vadd.f32 %v36, 1e-06
    %v38 = vadd.f32 %v32, 1e-06
    %v39 = vstv %s34
    %v40 = vmul.f32 %v38, %v39
    %v41 = vmul.f32 %v40, %v37
    %v42 = vmin.f32 %v41, 0.99
    %v43 = vsub.f32 1.0, %v42
    %v44 = vadd.f32 %v43, 1e-06
    %v45 = vrcp.pop %v44
    %v46 = vmul.f32 %v42, %v45
    %v47 = vmul.f32 %v46, %v37
    %v48 = vmul.f32 %v47, 0.5
    %v49 = vmul.f32 %v40, %v48
    %s50 = smul.u32 0, 8
    %v51 = vlaneseq
    %v52 = vshrl.u32 %v51, 7
    %v53 = vstv %s50
    %v54 = vadd.s32 %v52, %v53
    %v55 = vlaneseq
    %v56 = vand.u32 %v55, 127
    %v57 = vmul.u32 %v54, 128
    %v58 = vadd.s32 %v57, %v56
    %vm59 = vcmp.lt.s32.totalorder %v58, 16
    %v60 = vsel %vm59, %v48, inf
    %61 = vmin.xlane.f32.xlu0 %v60
    %v62 = vpop.xlane.xlu0 %61
    %v63 = vrot.slane %v62, 4
    %v64 = vmin.f32 %v62, %v63
    %v65 = vrot.slane %v64, 2
    %v66 = vmin.f32 %v64, %v65
    %v67 = vrot.slane %v66, 1
    %v68 = vmin.f32 %v66, %v67
    %69 = vst [vmem:[%s3] sm:$0xff] %v68
    %v70 = vsel %vm59, %v48, -inf
    %71 = vmax.xlane.f32.xlu0 %v70
    %v72 = vpop.xlane.xlu0 %71
    %v73 = vrot.slane %v72, 4
    %v74 = vmax.f32 %v72, %v73
    %v75 = vrot.slane %v74, 2
    %v76 = vmax.f32 %v74, %v75
    %v77 = vrot.slane %v76, 1
    %v78 = vmax.f32 %v76, %v77
    %79 = vst [vmem:[%s4] sm:$0xff] %v78
    %v80 = vsel %vm59, %v49, inf
    %81 = vmin.xlane.f32.xlu0 %v80
    %v82 = vpop.xlane.xlu0 %81
    %v83 = vrot.slane %v82, 4
    %v84 = vmin.f32 %v82, %v83
    %v85 = vrot.slane %v84, 2
    %v86 = vmin.f32 %v84, %v85
    %v87 = vrot.slane %v86, 1
    %v88 = vmin.f32 %v86, %v87
    %89 = vst [vmem:[%s5] sm:$0xff] %v88
    %v90 = vsel %vm59, %v49, -inf
    %91 = vmax.xlane.f32.xlu0 %v90
    %v92 = vpop.xlane.xlu0 %91
    %v93 = vrot.slane %v92, 4
    %v94 = vmax.f32 %v92, %v93
    %v95 = vrot.slane %v94, 2
    %v96 = vmax.f32 %v94, %v95
    %v97 = vrot.slane %v96, 1
    %v98 = vmax.f32 %v96, %v97
    %99 = vst [vmem:[%s6] sm:$0xff] %v98
    // Predicated region
    $region18: #{_pallas_forward.2} parent=1 // pred_check
      _
    $region19: #{_pallas_forward.2} parent=1 // pred_check_branch
      %101 = sbr.rel (0) target = $region21
    $region20: #{_pallas_forward.2} parent=1 // pred_region
      _
    $region21: #{_pallas_forward.2} parent=1 // pred_fallthru
      _
    // Predicated region
    $region22: #{_pallas_forward.2} parent=1 // pred_check
      _
    $region23: #{_pallas_forward.2} parent=1 // pred_check_branch
      %103 = sbr.rel (0) target = $region25
    $region24: #{_pallas_forward.2} parent=1 // pred_region
      _
    $region25: #{_pallas_forward.2} parent=1 // pred_fallthru
      _
    // Predicated region
    $region26: #{_pallas_forward.2} parent=1 // pred_check
      _
    $region27: #{_pallas_forward.2} parent=1 // pred_check_branch
      %105 = sbr.rel (0) target = $region29
    $region28: #{_pallas_forward.2} parent=1 // pred_region
      _
    $region29: #{_pallas_forward.2} parent=1 // pred_fallthru
      _
    // Predicated region
    $region30: #{_pallas_forward.2} parent=1 // pred_check
      _
    $region31: #{_pallas_forward.2} parent=1 // pred_check_branch
      %107 = sbr.rel (0) target = $region33
    $region32: #{_pallas_forward.2} parent=1 // pred_region
      _
    $region33: #{_pallas_forward.2} parent=1 // pred_fallthru
      _
    // Predicated region
    $region34: #{_pallas_forward.2} parent=1 // pred_check
      _
    $region35: #{_pallas_forward.2} parent=1 // pred_check_branch
      %109 = sbr.rel (0) target = $region37
    $region36: #{_pallas_forward.2} parent=1 // pred_region
      _
    $region37: #{_pallas_forward.2} parent=1 // pred_fallthru
      _
    // Predicated region
    $region38: #{_pallas_forward.2} parent=1 // pred_check
      _
    $region39: #{_pallas_forward.2} parent=1 // pred_check_branch
      %111 = sbr.rel (0) target = $region41
    $region40: #{_pallas_forward.2} parent=1 // pred_region
      _
    $region41: #{_pallas_forward.2} parent=1 // pred_fallthru
      _
    // Predicated region
    $region42: #{_pallas_forward.2} parent=1 // pred_check
      _
    $region43: #{_pallas_forward.2} parent=1 // pred_check_branch
      %113 = sbr.rel (0) target = $region45
    $region44: #{_pallas_forward.2} parent=1 // pred_region
      _
    $region45: #{_pallas_forward.2} parent=1 // pred_fallthru
      _
    // Predicated region
    $region46: #{_pallas_forward.2} parent=1 // pred_check
      _
    $region47: #{_pallas_forward.2} parent=1 // pred_check_branch
      %115 = sbr.rel (0) target = $region49
    $region48: #{_pallas_forward.2} parent=1 // pred_region
      _
    $region49: #{_pallas_forward.2} parent=1 // pred_fallthru
      _
    %116 = vsyncpa [#allocation3], 1

</llo_original>
